<compile_context>
chip_gen: v7x
topology: tpu7x:2x2x1
jax: 0.10.0
libtpu: 0.0.40
codegen_flags: <defaults>
</compile_context>

<pallas_src>
import math
import functools

import jax
import jax.numpy as jnp
from jax.experimental import pallas as pl
from jax.experimental.pallas import tpu as pltpu


_LANE = 128
_SUBLANE = 8
_MAX_TILE_COLS = 16384                    # lane-dense column tile cap (multiple of 128)
_VMEM_BUDGET_BYTES = 20 * 1024 * 1024     # bigger tiles per review; < 32 MiB scoped
_VMEM_LIMIT_BYTES = 32 * 1024 * 1024      # explicit scoped-VMEM limit (safe v5e/v6e/v7x)
_MEGACORE_MIN_BYTES = 1 * 1024 * 1024     # only force a 2-way split for slabs >= 1 MiB


# ----------------------------- kernels ------------------------------------- #

def _pos_enc_kernel(x_ref, pe_ref, o_ref, *, scale):
    # x_ref/o_ref: (tile_b, tile_c) lane-dense slab; pe_ref: (1, tile_c) float32,
    # broadcast over the row (batch) axis. Compute in f32, store in x dtype.
    x = x_ref[...].astype(jnp.float32)
    o_ref[...] = (x * scale + pe_ref[...]).astype(o_ref.dtype)


def _neck2seq_pe_kernel(x_ref, w_ref, b_ref, pe_ref, o_ref, *, scale):
    # Fused Neck2Seq matmul + scale + PE-add epilogue.
    # x_ref: (tile_b, neck); w_ref: (neck, tile_c); b_ref/pe_ref: (1, tile_c).
    acc = jnp.dot(x_ref[...].astype(jnp.float32), w_ref[...].astype(jnp.float32),
                  preferred_element_type=jnp.float32)
    o_ref[...] = ((acc + b_ref[...].astype(jnp.float32)) * scale
                  + pe_ref[...]).astype(o_ref.dtype)


# ----------------------------- helpers ------------------------------------- #

def _round_down_multiple(x: int, m: int) -> int:
    return (x // m) * m


def _round_up_multiple(x: int, m: int) -> int:
    return ((x + m - 1) // m) * m


def make_positional_encoding(max_seq_len: int, d_model: int) -> jnp.ndarray:
    """Deterministic sin/cos table identical to _generate_positional_encoding."""
    assert d_model % 2 == 0, "PositionalEncoder requires an even d_model"
    position = jnp.arange(max_seq_len, dtype=jnp.float32)[:, None]            # (L, 1)
    div_term = jnp.exp(
        jnp.arange(0, d_model, 2, dtype=jnp.float32) * (-math.log(10000.0) / d_model)
    )                                                                          # (D/2,)
    angles = position * div_term                                               # (L, D/2)
    pe = jnp.zeros((max_seq_len, d_model), dtype=jnp.float32)
    pe = pe.at[:, 0::2].set(jnp.sin(angles))
    pe = pe.at[:, 1::2].set(jnp.cos(angles))
    return pe[None, :, :]                                                      # (1, L, D)


@functools.lru_cache(maxsize=None)
def lane_dense_pe(max_seq_len: int, d_model: int, seq_len: int) -> jnp.ndarray:
    """Cached (1, seq_len*d_model) float32 lane-dense PE slab (hoisted from hot path)."""
    pe = make_positional_encoding(max_seq_len, d_model)
    return pe[:, :seq_len, :].reshape(1, seq_len * d_model)


def _choose_tiles(b: int, row: int, itemsize: int, k_cols=None):
    """Pick (tile_b, tile_c, ni, nj).

    k_cols=None  -> elementwise kernel: x block is (tile_b, tile_c).
    k_cols=int K -> fused matmul kernel: x block is (tile_b, K), plus a (K, tile_c)
                    weight column block resident per column tile.
    """
    # Column (lane) tile: 128-multiple cap; partial last block is legal so the
    # VMEM budget is honored even when row is not a multiple of 128.
    tile_c = _MAX_TILE_COLS if row > _MAX_TILE_COLS else row

    # Double-buffered per-column-block footprint that does not scale with tile_b.
    if k_cols is None:
        fixed = 2 * _SUBLANE * tile_c * 4                                  # PE block (8-sublane padded)
        per_row = 2 * 2 * tile_c * itemsize                                # x + out blocks
    else:
        fixed = 2 * k_cols * tile_c * 4 + 2 * 2 * _SUBLANE * tile_c * 4    # W + (bias, PE)
        per_row = 2 * (k_cols + tile_c) * itemsize                         # x + out blocks
    avail = max(_VMEM_BUDGET_BYTES - fixed, 2 * 1024 * 1024)

    tile_b = max(1, avail // per_row)
    if tile_b >= b:
        tile_b = b                                      # single block over batch
    else:
        tile_b = max(_SUBLANE, _round_down_multiple(tile_b, _SUBLANE))
    ni = pl.cdiv(b, tile_b)
    nj = pl.cdiv(row, tile_c)

    # Megacore (v7x has 2 TensorCores): if everything landed in one block and the
    # slab is big enough to be worth an extra grid step, split exactly one axis.
    if ni * nj < 2 and b * row * itemsize > _MEGACORE_MIN_BYTES:
        if b >= 2 * _SUBLANE:
            tile_b = max(_SUBLANE, _round_down_multiple(pl.cdiv(b, 2), _SUBLANE))
            ni = pl.cdiv(b, tile_b)
        elif row >= 2 * _LANE:
            tile_c = _round_up_multiple(pl.cdiv(row, 2), _LANE)
            nj = pl.cdiv(row, tile_c)
    return tile_b, tile_c, ni, nj


# ----------------------------- wrappers ------------------------------------ #

def positional_encoder(x: jnp.ndarray, pe_slab: jnp.ndarray, d_model: int) -> jnp.ndarray:
    """x: (B, S, D); pe_slab: (1, S*D) float32 (precomputed). Returns x*sqrt(D)+pe."""
    b, seq_len, d = x.shape
    assert d == d_model
    row = seq_len * d
    assert pe_slab.shape == (1, row) and pe_slab.dtype == jnp.float32
    scale = math.sqrt(d_model)

    x2 = x.reshape(b, row)                      # lane-dense slab
    itemsize = jnp.dtype(x.dtype).itemsize
    tile_b, tile_c, ni, nj = _choose_tiles(b, row, itemsize)

    kernel = functools.partial(_pos_enc_kernel, scale=scale)
    out2 = pl.pallas_call(
        kernel,
        out_shape=jax.ShapeDtypeStruct((b, row), x.dtype),
        # Columns outer, rows inner: the PE column block is constant across the
        # inner axis, so it is DMA'd only when the column block changes.
        grid=(nj, ni),
        in_specs=[
            pl.BlockSpec((tile_b, tile_c), lambda j, i: (i, j)),   # x
            pl.BlockSpec((1, tile_c), lambda j, i: (0, j)),        # PE (f32, resident)
        ],
        out_specs=pl.BlockSpec((tile_b, tile_c), lambda j, i: (i, j)),
        compiler_params=pltpu.CompilerParams(
            dimension_semantics=("parallel", "parallel"),
            vmem_limit_bytes=_VMEM_LIMIT_BYTES),
    )(x2, pe_slab)
    return out2.reshape(b, seq_len, d)


def neck2seq_positional_encoder(x, w_stack, b_stack, pe_slab, d_model):
    """Fused Neck2Seq + PositionalEncoder (decoder embed path).

    out[b, s, :] = (x[b] @ w_stack[s] + b_stack[s]) * sqrt(d_model) + pe[0, s]
    x: (B, neck); w_stack: (S, neck, D); b_stack: (S, D); pe_slab: (1, S*D) f32.
    """
    b, neck = x.shape
    s, neck_w, d = w_stack.shape
    assert neck_w == neck and d == d_model
    row = s * d
    assert pe_slab.shape == (1, row) and pe_slab.dtype == jnp.float32
    scale = math.sqrt(d_model)

    # Lane-dense parameter slabs (in a real model these are cached at init).
    w_flat = jnp.transpose(w_stack, (1, 0, 2)).reshape(neck, row)
    b_flat = b_stack.reshape(1, row)

    itemsize = jnp.dtype(x.dtype).itemsize
    tile_b, tile_c, ni, nj = _choose_tiles(b, row, itemsize, k_cols=neck)

    kernel = functools.partial(_neck2seq_pe_kernel, scale=scale)
    out2 = pl.pallas_call(
        kernel,
        out_shape=jax.ShapeDtypeStruct((b, row), x.dtype),
        grid=(nj, ni),   # rows inner: W / bias / PE column blocks stay resident
        in_specs=[
            pl.BlockSpec((tile_b, neck), lambda j, i: (i, 0)),     # x
            pl.BlockSpec((neck, tile_c), lambda j, i: (0, j)),     # W (lane-dense)
            pl.BlockSpec((1, tile_c), lambda j, i: (0, j)),        # bias
            pl.BlockSpec((1, tile_c), lambda j, i: (0, j)),        # PE (f32, resident)
        ],
        out_specs=pl.BlockSpec((tile_b, tile_c), lambda j, i: (i, j)),
        compiler_params=pltpu.CompilerParams(
            dimension_semantics=("parallel", "parallel"),
            vmem_limit_bytes=_VMEM_LIMIT_BYTES),
    )(x, w_flat, b_flat, pe_slab)
    return out2.reshape(b, s, d)


# ----------------------------- self-test ----------------------------------- #

if __name__ == "__main__":
    d_model = 32
    max_seq_len = 80
    seq_len = 8
    batch = 2
    neck = 20

    key = jax.random.PRNGKey(0)
    k1, k2, k3, k4 = jax.random.split(key, 4)

    pe_slab = lane_dense_pe(max_seq_len, d_model, seq_len)       # (1, S*D) f32, cached
    pe3 = pe_slab.reshape(1, seq_len, d_model)

    # ---- standalone PositionalEncoder kernel (encoder branches) ----
    x = jax.random.normal(k1, (batch, seq_len, d_model), dtype=jnp.float32)
    out = jax.block_until_ready(positional_encoder(x, pe_slab, d_model))
    ref = x * math.sqrt(d_model) + pe3
    assert out.shape == (batch, seq_len, d_model)
    assert jnp.allclose(out, ref, atol=1e-5, rtol=1e-5)

    # bf16 activations: PE stays f32, compute in f32, single round to bf16 on store.
    xb = x.astype(jnp.bfloat16)
    outb = jax.block_until_ready(positional_encoder(xb, pe_slab, d_model))
    refb = (xb.astype(jnp.float32) * math.sqrt(d_model) + pe3).astype(jnp.bfloat16)
    assert outb.dtype == jnp.bfloat16
    assert jnp.allclose(outb.astype(jnp.float32), refb.astype(jnp.float32),
                        atol=1e-2, rtol=1e-2)

    # ---- fused Neck2Seq + PositionalEncoder kernel (decoder branch) ----
    neck_t = jnp.tanh(jax.random.normal(k2, (batch, neck), dtype=jnp.float32))
    w_stack = jax.random.normal(k3, (seq_len, neck, d_model), dtype=jnp.float32) / math.sqrt(neck)
    b_stack = jax.random.normal(k4, (seq_len, d_model), dtype=jnp.float32) * 0.02
    out2 = jax.block_until_ready(
        neck2seq_positional_encoder(neck_t, w_stack, b_stack, pe_slab, d_model))
    ref2 = (jnp.einsum("bn,snd->bsd", neck_t, w_stack) + b_stack[None, :, :]) \
        * math.sqrt(d_model) + pe3
    assert out2.shape == (batch, seq_len, d_model)
    assert jnp.allclose(out2, ref2, atol=2e-3, rtol=2e-3)

    print("KERNEL_OK")
</pallas_src>

<mosaic_0001>
module attributes {stable_mosaic.version = 11 : i64} {
  func.func @_pos_enc_kernel(%arg0: i32, %arg1: i32, %arg2: memref<2x256xf32, #tpu.memory_space<vmem>>, %arg3: memref<1x256xf32, #tpu.memory_space<vmem>>, %arg4: memref<2x256xf32, #tpu.memory_space<vmem>>) attributes {dimension_semantics = [#tpu.dimension_semantics<parallel>, #tpu.dimension_semantics<parallel>], iteration_bounds = array<i64: 1, 1>, scalar_prefetch = 0 : i64, scratch_operands = 0 : i64, tpu.core_type = #tpu.core_type<tc>, window_params = [{transform_indices = @transform_0, window_bounds = array<i64: 2, 256>}, {transform_indices = @transform_1, window_bounds = array<i64: 1, 256>}, {transform_indices = @transform_2, window_bounds = array<i64: 2, 256>}]} {
    %c0 = arith.constant 0 : index
    %c0_0 = arith.constant 0 : index
    %0 = vector.load %arg2[%c0, %c0_0] : memref<2x256xf32, #tpu.memory_space<vmem>>, vector<2x256xf32>
    %cst = arith.constant 5.65685415 : f32
    %1 = vector.broadcast %cst : f32 to vector<2x256xf32>
    %2 = arith.mulf %0, %1 : vector<2x256xf32>
    %c0_1 = arith.constant 0 : index
    %c0_2 = arith.constant 0 : index
    %3 = vector.load %arg3[%c0_1, %c0_2] : memref<1x256xf32, #tpu.memory_space<vmem>>, vector<1x256xf32>
    %4 = vector.broadcast %3 : vector<1x256xf32> to vector<2x256xf32>
    %5 = arith.addf %2, %4 : vector<2x256xf32>
    %c0_3 = arith.constant 0 : index
    %c0_4 = arith.constant 0 : index
    %6 = vector.load %arg4[%c0_3, %c0_4] : memref<2x256xf32, #tpu.memory_space<vmem>>, vector<2x256xf32>
    tpu.vector_store %arg4[%c0_3, %c0_4], %5 {strides = array<i32>} : memref<2x256xf32, #tpu.memory_space<vmem>>, vector<2x256xf32>,
    return
  }
  func.func @transform_0(%arg0: i32, %arg1: i32) -> (i32, i32) {
    %c0_i32 = arith.constant 0 : i32
    return %arg1, %arg0 : i32, i32
  }
  func.func @transform_1(%arg0: i32, %arg1: i32) -> (i32, i32) {
    %c0_i32 = arith.constant 0 : i32
    %c0_i32_0 = arith.constant 0 : i32
    return %c0_i32, %arg0 : i32, i32
  }
  func.func @transform_2(%arg0: i32, %arg1: i32) -> (i32, i32) {
    %c0_i32 = arith.constant 0 : i32
    return %arg1, %arg0 : i32, i32
  }
}

</mosaic_0001>

<llo_original>
// kernel: tpu_custom_call.1
$region0: #{tpu_custom_call.1}
  #allocation0 [shape = 'u32[]', space=smem, size = 0x4, offset = 0x4, fixed_abs, tag = 'smem constant byte address 0x4 - core index']
  #allocation1 [shape = 'u32[144,128]{1,0:T(1,128)}', space=vmem, size = 0x12000, scoped, tag = 'internal scratch']
  %s0 = inlined_call_operand.hbm [shape: f32[2,256], index: 0, kind: input, shape index: {}]
  %s1 = inlined_call_operand.vmem [shape: f32[1,256], index: 1, kind: input, shape index: {}]
  %s2 = inlined_call_operand.hbm [shape: f32[2,256], index: 2, kind: output, shape index: {}]
  %s3 = sld [smem:[#allocation0]]
  $region22: #{tpu_custom_call.1} parent=0
    _
  %s5 = ssub.s32 1, %s3
  %s6 = scalar_select 0, %s5, %s3
  $region1: #{tpu_custom_call.1} parent=0
    #allocation2 [shape = 'u8[2048]{0}', space=vmem, size = 0x800, scoped, tag = 'input window, operand 0, single buffered']
    #allocation3 [shape = 's32[1]{0}', space=sflag, size = 0x4, scoped, tag = 'scoped memory for tpu_custom_call.1']
    #allocation4 [shape = 's32[1]{0}', space=sflag, size = 0x4, scoped, tag = 'scoped memory for tpu_custom_call.1']
    #allocation5 [shape = 'u8[2048]{0}', space=vmem, size = 0x800, scoped, tag = 'output window, operand 0, single buffered']
    %7 = vsyncpa [#allocation3], 0
    %8 = vsyncpa [#allocation4], 0
    // Predicated region
    $region2: #{tpu_custom_call.1} parent=1 // pred_check
      _
    $region3: #{tpu_custom_call.1} parent=1 // pred_check_branch
      %10 = sbr.rel (0) target = $region5
    $region4: #{tpu_custom_call.1} parent=1 // pred_region
      %s12 = ssub.s32 64, 64
      %13 = vsyncadd [#allocation3], %s12
      %s15 = sshll.u32 [#allocation2], 4
      %s16 = int_to_ptr.vmem [resolvable:$true] %s15
      %18 = dma.hbm_to_vmem [thread:$0]  %s0, 64, %s16, [#allocation3]
    $region5: #{tpu_custom_call.1} parent=1 // pred_fallthru
      _
    // Predicated region
    $region6: #{tpu_custom_call.1} parent=1 // pred_check
      _
    $region7: #{tpu_custom_call.1} parent=1 // pred_check_branch
      %20 = sbr.rel (0) target = $region9
    $region8: #{tpu_custom_call.1} parent=1 // pred_region
      _
    $region9: #{tpu_custom_call.1} parent=1 // pred_fallthru
      _
    // Predicated region
    $region10: #{tpu_custom_call.1} parent=1 // pred_check
      _
    $region11: #{tpu_custom_call.1} parent=1 // pred_check_branch
      %22 = sbr.rel (0) target = $region13
    $region12: #{tpu_custom_call.1} parent=1 // pred_region
      %23 = dma.done [#allocation3], 64
    $region13: #{tpu_custom_call.1} parent=1 // pred_fallthru
      _
    %v24 = vld [vmem:[#allocation2] sm:$0xf]
    %v25 = vmul.f32 %v24, 5.656854
    %v26 = vld [vmem:[%s1] sm:$0x3]
    %v28 = vlaneseq
    %v29 = vshrl.u32 %v28, 7
    %v30 = vsub.s32 0, %v29
    %v31 = vrot.slane %v26, %v30
    %v32 = vlaneseq
    %v33 = vshrl.u32 %v32, 7
    %v34 = vsub.s32 1, %v33
    %v35 = vrot.slane %v26, %v34
    %v36 = vcombine.low %v31, %v35
    %v38 = vunpack.c.l.s4 1983009808
    %v39 = vunpack.c.0.s8 %v38
    %v40 = vlaneseq
    %v41 = vshrl.u32 %v40, 7
    %v42 = vsub.s32 %v39, %v41
    %v43 = vrot.slane %v36, %v42
    %v45 = vadd.f32 %v25, %v43
    %46 = vst [vmem:[#allocation5] sm:$0xf] %v45
    // Predicated region
    $region14: #{tpu_custom_call.1} parent=1 // pred_check
      _
    $region15: #{tpu_custom_call.1} parent=1 // pred_check_branch
      %48 = sbr.rel (0) target = $region17
    $region16: #{tpu_custom_call.1} parent=1 // pred_region
      %s50 = ssub.s32 64, 64
      %51 = vsyncadd [#allocation4], %s50
      %s53 = sshll.u32 [#allocation5], 4
      %s54 = int_to_ptr.vmem [resolvable:$true] %s53
      %56 = dma.vmem_to_hbm [thread:$0]  %s54, 64, %s2, [#allocation4]
    $region17: #{tpu_custom_call.1} parent=1 // pred_fallthru
      _
    // Predicated region
    $region18: #{tpu_custom_call.1} parent=1 // pred_check
      _
    $region19: #{tpu_custom_call.1} parent=1 // pred_check_branch
      %58 = sbr.rel (0) target = $region21
    $region20: #{tpu_custom_call.1} parent=1 // pred_region
      %59 = dma.done [#allocation4], 64
    $region21: #{tpu_custom_call.1} parent=1 // pred_fallthru
      _
    %60 = vsyncpa [#allocation3], 1
    %61 = vsyncpa [#allocation4], 1

</llo_original>
